<compile_context>
chip_gen: v7x
topology: tpu7x:2x2x1
jax: 0.10.0
libtpu: 0.0.40
codegen_flags: <defaults>
</compile_context>

<pallas_src>
import jax
import jax.numpy as jnp
from jax.experimental import pallas as pl
from jax.experimental.pallas import tpu as pltpu


def _round_up(x, m):
    return ((x + m - 1) // m) * m


def gin_kernel(e1_ref, a_ref, xk_ref, xi_ref, diag_ref,
               w1_ref, b1_ref, w2_ref, b2_ref, wc_ref, bc_ref,
               o_ref, acc_ref):
    k = pl.program_id(1)

    @pl.when(k == 0)
    def _init():
        acc_ref[...] = jnp.zeros_like(acc_ref)

    # Neighbor aggregation on the MXU: acc += A_tile @ X_tile  (bf16 in, f32 acc).
    acc_ref[...] += jnp.dot(a_ref[...], xk_ref[...],
                            preferred_element_type=jnp.float32)

    @pl.when(k == pl.num_programs(1) - 1)
    def _finalize():
        e1 = e1_ref[0, 0]
        # H = A @ X + e1 * diag(A) * X   ( == (1 + e1) * diag*X + offdiag@X )
        h = acc_ref[...] + e1 * (diag_ref[...] * xi_ref[...].astype(jnp.float32))

        # MLP1: relu(fc2(relu(fc1(H))))  -- small resident f32 weights.
        h1 = jnp.maximum(
            jnp.dot(h, w1_ref[...], preferred_element_type=jnp.float32)
            + b1_ref[...], 0.0)
        h2 = jnp.maximum(
            jnp.dot(h1, w2_ref[...], preferred_element_type=jnp.float32)
            + b2_ref[...], 0.0)

        # classifier head (no activation), lane-dense (C padded to 128) store.
        o_ref[...] = (jnp.dot(h2, wc_ref[...], preferred_element_type=jnp.float32)
                      + bc_ref[...]).astype(o_ref.dtype)


def gin_batched_forward(X, A_hat, params):
    N, D = X.shape
    C = params["wc"].shape[0]
    f32 = jnp.float32

    # ---- padded, lane-dense shapes -------------------------------------------------
    D_pad = _round_up(D, 128)
    C_pad = _round_up(C, 128)
    if N <= 128:
        n_pad, tm, tk = 128, 128, 128
    elif N <= 256:
        n_pad, tm, tk = 256, 256, 256
    else:
        tm, tk = 256, 512
        n_pad = _round_up(N, tk)

    # ---- big streams in bf16 (f32 accumulation in-kernel) ---------------------------
    A_bf = A_hat.astype(jnp.bfloat16)
    X_bf = X.astype(jnp.bfloat16)
    A_p = jnp.zeros((n_pad, n_pad), jnp.bfloat16).at[:N, :N].set(A_bf)
    X_p = jnp.zeros((n_pad, D_pad), jnp.bfloat16).at[:N, :D].set(X_bf)
    diag_p = jnp.zeros((n_pad, 1), f32).at[:N, :].set(
        jnp.diag(A_bf).astype(f32)[:, None])

    # ---- small resident parameters in f32 -------------------------------------------
    e1 = params["e1"].reshape(1, 1).astype(f32)
    # PyTorch Linear: y = x @ W.T + b with W: (out, in) -> pre-transpose to (in, out).
    w1t = jnp.zeros((D_pad, D_pad), f32).at[:D, :D].set(params["w1"].T.astype(f32))
    w2t = jnp.zeros((D_pad, D_pad), f32).at[:D, :D].set(params["w2"].T.astype(f32))
    wct = jnp.zeros((D_pad, C_pad), f32).at[:D, :C].set(params["wc"].T.astype(f32))
    b1 = jnp.zeros((1, D_pad), f32).at[:, :D].set(params["b1"].reshape(1, D).astype(f32))
    b2 = jnp.zeros((1, D_pad), f32).at[:, :D].set(params["b2"].reshape(1, D).astype(f32))
    bc = jnp.zeros((1, C_pad), f32).at[:, :C].set(params["bc"].reshape(1, C).astype(f32))

    grid = (n_pad // tm, n_pad // tk)

    grid_spec = pltpu.PrefetchScalarGridSpec(
        num_scalar_prefetch=0,
        grid=grid,
        in_specs=[
            pl.BlockSpec((1, 1), lambda i, k: (0, 0),
                         memory_space=pltpu.MemorySpace.SMEM),     # e1 scalar
            pl.BlockSpec((tm, tk), lambda i, k: (i, k)),           # A_hat tile
            pl.BlockSpec((tk, D_pad), lambda i, k: (k, 0)),        # X (contraction)
            pl.BlockSpec((tm, D_pad), lambda i, k: (i, 0)),        # X (row tile, self term)
            pl.BlockSpec((tm, 1), lambda i, k: (i, 0)),            # diag(A) row tile
            pl.BlockSpec((D_pad, D_pad), lambda i, k: (0, 0)),     # w1 (resident)
            pl.BlockSpec((1, D_pad), lambda i, k: (0, 0)),         # b1
            pl.BlockSpec((D_pad, D_pad), lambda i, k: (0, 0)),     # w2
            pl.BlockSpec((1, D_pad), lambda i, k: (0, 0)),         # b2
            pl.BlockSpec((D_pad, C_pad), lambda i, k: (0, 0)),     # wc
            pl.BlockSpec((1, C_pad), lambda i, k: (0, 0)),         # bc
        ],
        out_specs=pl.BlockSpec((tm, C_pad), lambda i, k: (i, 0)),
        scratch_shapes=[pltpu.VMEM((tm, D_pad), jnp.float32)],     # f32 accumulator
    )

    flops = (2 * n_pad * n_pad * D_pad                 # aggregation
             + 2 * 2 * n_pad * D_pad * D_pad           # two MLP layers
             + 2 * n_pad * D_pad * C_pad)              # classifier
    bytes_accessed = (n_pad * n_pad * 2                # A (bf16)
                      + 2 * n_pad * D_pad * 2          # X streamed twice (bf16)
                      + n_pad * 4                      # diag
                      + 2 * D_pad * D_pad * 4 + D_pad * C_pad * 4  # weights
                      + (2 * D_pad + C_pad) * 4        # biases
                      + n_pad * C_pad * 4)             # output

    out_padded = pl.pallas_call(
        gin_kernel,
        out_shape=jax.ShapeDtypeStruct((n_pad, C_pad), jnp.float32),
        grid_spec=grid_spec,
        compiler_params=pltpu.CompilerParams(
            dimension_semantics=("parallel", "arbitrary"),
            vmem_limit_bytes=32 * 1024 * 1024,
        ),
        cost_estimate=pl.CostEstimate(
            flops=flops, transcendentals=0, bytes_accessed=bytes_accessed),
    )(e1, A_p, X_p, X_p, diag_p, w1t, b1, w2t, b2, wct, bc)

    return out_padded[:N, :C]


def gin_batched_reference(X, A_hat, params):
    # Same bf16 input quantization as the kernel's A/X streams, math in f32.
    A32 = A_hat.astype(jnp.bfloat16).astype(jnp.float32)
    X32 = X.astype(jnp.bfloat16).astype(jnp.float32)
    diag_vec = jnp.diag(A32)[:, None]
    e1 = params["e1"].reshape(())
    H = A32 @ X32 + e1 * (diag_vec * X32)
    H1 = jax.nn.relu(H @ params["w1"].T + params["b1"])
    H2 = jax.nn.relu(H1 @ params["w2"].T + params["b2"])
    return H2 @ params["wc"].T + params["bc"]


def init_params(key, X_size, num_classes):
    ks = jax.random.split(key, 7)
    var = 2.0 / (1 + 1)  # matches e1 init variance expression in the module
    bound = 1.0 / jnp.sqrt(X_size)
    return {
        "e1": var * jax.random.normal(ks[0], (1, 1), jnp.float32),
        "w1": jax.random.uniform(ks[1], (X_size, X_size), jnp.float32, -bound, bound),
        "b1": jax.random.uniform(ks[2], (X_size,), jnp.float32, -bound, bound),
        "w2": jax.random.uniform(ks[3], (X_size, X_size), jnp.float32, -bound, bound),
        "b2": jax.random.uniform(ks[4], (X_size,), jnp.float32, -bound, bound),
        "wc": jax.random.uniform(ks[5], (num_classes, X_size), jnp.float32, -bound, bound),
        "bc": jax.random.uniform(ks[6], (num_classes,), jnp.float32, -bound, bound),
    }


if __name__ == "__main__":
    n_nodes, X_size, num_classes = 8, 32, 8

    key = jax.random.PRNGKey(0)
    k_x, k_a, k_p = jax.random.split(key, 3)

    X = jax.random.normal(k_x, (n_nodes, X_size), jnp.float32)
    A_raw = jax.random.uniform(k_a, (n_nodes, n_nodes), jnp.float32)
    A_hat = 0.5 * (A_raw + A_raw.T) + jnp.eye(n_nodes, dtype=jnp.float32)

    params = init_params(k_p, X_size, num_classes)

    out = gin_batched_forward(X, A_hat, params)
    out = jax.block_until_ready(out)

    ref = gin_batched_reference(X, A_hat, params)
    assert out.shape == (n_nodes, num_classes)
    assert jnp.allclose(out, ref, atol=5e-4, rtol=5e-4), float(
        jnp.max(jnp.abs(out - ref)))

    print("KERNEL_OK")
</pallas_src>

<mosaic_0001>
module attributes {stable_mosaic.version = 11 : i64} {
  func.func @gin_kernel(%arg0: i32, %arg1: i32, %arg2: memref<1x1xf32, #tpu.memory_space<smem>>, %arg3: memref<128x128xbf16, #tpu.memory_space<vmem>>, %arg4: memref<128x128xbf16, #tpu.memory_space<vmem>>, %arg5: memref<128x128xbf16, #tpu.memory_space<vmem>>, %arg6: memref<128x1xf32, #tpu.memory_space<vmem>>, %arg7: memref<128x128xf32, #tpu.memory_space<vmem>>, %arg8: memref<1x128xf32, #tpu.memory_space<vmem>>, %arg9: memref<128x128xf32, #tpu.memory_space<vmem>>, %arg10: memref<1x128xf32, #tpu.memory_space<vmem>>, %arg11: memref<128x128xf32, #tpu.memory_space<vmem>>, %arg12: memref<1x128xf32, #tpu.memory_space<vmem>>, %arg13: memref<128x128xf32, #tpu.memory_space<vmem>>, %arg14: memref<128x128xf32, #tpu.memory_space<vmem>>) attributes {dimension_semantics = [#tpu.dimension_semantics<parallel>, #tpu.dimension_semantics<arbitrary>], iteration_bounds = array<i64: 1, 1>, scalar_prefetch = 0 : i64, scratch_operands = 1 : i64, tpu.core_type = #tpu.core_type<tc>, window_params = [{transform_indices = @transform_0, window_bounds = array<i64: 1, 1>}, {transform_indices = @transform_1, window_bounds = array<i64: 128, 128>}, {transform_indices = @transform_2, window_bounds = array<i64: 128, 128>}, {transform_indices = @transform_3, window_bounds = array<i64: 128, 128>}, {transform_indices = @transform_4, window_bounds = array<i64: 128, 1>}, {pipeline_mode = #tpu.pipeline_mode<synchronous>, transform_indices = @transform_5, window_bounds = array<i64: 128, 128>}, {pipeline_mode = #tpu.pipeline_mode<synchronous>, transform_indices = @transform_6, window_bounds = array<i64: 1, 128>}, {pipeline_mode = #tpu.pipeline_mode<synchronous>, transform_indices = @transform_7, window_bounds = array<i64: 128, 128>}, {pipeline_mode = #tpu.pipeline_mode<synchronous>, transform_indices = @transform_8, window_bounds = array<i64: 1, 128>}, {pipeline_mode = #tpu.pipeline_mode<synchronous>, transform_indices = @transform_9, window_bounds = array<i64: 128, 128>}, {pipeline_mode = #tpu.pipeline_mode<synchronous>, transform_indices = @transform_10, window_bounds = array<i64: 1, 128>}, {transform_indices = @transform_11, window_bounds = array<i64: 128, 128>}]} {
    %c0_i32 = arith.constant 0 : i32
    %0 = arith.cmpi eq, %arg1, %c0_i32 : i32
    %1 = arith.extui %0 : i1 to i32
    %c0_i32_0 = arith.constant 0 : i32
    %2 = arith.cmpi ne, %1, %c0_i32_0 : i32
    scf.if %2 {
      %cst_10 = arith.constant 0.000000e+00 : f32
      %12 = vector.broadcast %cst_10 : f32 to vector<128x128xf32>
      %c0_11 = arith.constant 0 : index
      %c0_12 = arith.constant 0 : index
      %13 = vector.load %arg14[%c0_11, %c0_12] : memref<128x128xf32, #tpu.memory_space<vmem>>, vector<128x128xf32>
      tpu.vector_store %arg14[%c0_11, %c0_12], %12 {strides = array<i32>} : memref<128x128xf32, #tpu.memory_space<vmem>>, vector<128x128xf32>,
    } else {
    }
    %c0 = arith.constant 0 : index
    %c0_1 = arith.constant 0 : index
    %3 = vector.load %arg14[%c0, %c0_1] : memref<128x128xf32, #tpu.memory_space<vmem>>, vector<128x128xf32>
    %c0_2 = arith.constant 0 : index
    %c0_3 = arith.constant 0 : index
    %4 = vector.load %arg3[%c0_2, %c0_3] : memref<128x128xbf16, #tpu.memory_space<vmem>>, vector<128x128xbf16>
    %c0_4 = arith.constant 0 : index
    %c0_5 = arith.constant 0 : index
    %5 = vector.load %arg4[%c0_4, %c0_5] : memref<128x128xbf16, #tpu.memory_space<vmem>>, vector<128x128xbf16>
    %cst = arith.constant dense<0.000000e+00> : vector<128x128xf32>
    %6 = tpu.matmul %4, %5, %cst {dimension_numbers = #tpu.dot_dimension_numbers<[1], [0], [0], [1], [0, 0, 1, 1], [], []>} : vector<128x128xbf16>, vector<128x128xbf16>, vector<128x128xf32> -> vector<128x128xf32>
    %7 = arith.addf %3, %6 : vector<128x128xf32>
    %c0_6 = arith.constant 0 : index
    %c0_7 = arith.constant 0 : index
    %8 = vector.load %arg14[%c0_6, %c0_7] : memref<128x128xf32, #tpu.memory_space<vmem>>, vector<128x128xf32>
    tpu.vector_store %arg14[%c0_6, %c0_7], %7 {strides = array<i32>} : memref<128x128xf32, #tpu.memory_space<vmem>>, vector<128x128xf32>,
    %c0_i32_8 = arith.constant 0 : i32
    %9 = arith.cmpi eq, %arg1, %c0_i32_8 : i32
    %10 = arith.extui %9 : i1 to i32
    %c0_i32_9 = arith.constant 0 : i32
    %11 = arith.cmpi ne, %10, %c0_i32_9 : i32
    scf.if %11 {
      %c0_10 = arith.constant 0 : index
      %c0_11 = arith.constant 0 : index
      %12 = memref.load %arg2[%c0_10, %c0_11] : memref<1x1xf32, #tpu.memory_space<smem>>
      %c0_12 = arith.constant 0 : index
      %c0_13 = arith.constant 0 : index
      %13 = vector.load %arg14[%c0_12, %c0_13] : memref<128x128xf32, #tpu.memory_space<vmem>>, vector<128x128xf32>
      %c0_14 = arith.constant 0 : index
      %c0_15 = arith.constant 0 : index
      %14 = vector.load %arg6[%c0_14, %c0_15] : memref<128x1xf32, #tpu.memory_space<vmem>>, vector<128x1xf32>
      %c0_16 = arith.constant 0 : index
      %c0_17 = arith.constant 0 : index
      %15 = vector.load %arg5[%c0_16, %c0_17] : memref<128x128xbf16, #tpu.memory_space<vmem>>, vector<128x128xbf16>
      %16 = arith.extf %15 : vector<128x128xbf16> to vector<128x128xf32>
      %17 = vector.broadcast %14 : vector<128x1xf32> to vector<128x128xf32>
      %18 = arith.mulf %17, %16 : vector<128x128xf32>
      %19 = vector.broadcast %12 : f32 to vector<128x128xf32>
      %20 = arith.mulf %19, %18 : vector<128x128xf32>
      %21 = arith.addf %13, %20 : vector<128x128xf32>
      %c0_18 = arith.constant 0 : index
      %c0_19 = arith.constant 0 : index
      %22 = vector.load %arg7[%c0_18, %c0_19] : memref<128x128xf32, #tpu.memory_space<vmem>>, vector<128x128xf32>
      %cst_20 = arith.constant dense<0.000000e+00> : vector<128x128xf32>
      %23 = tpu.matmul %21, %22, %cst_20 {dimension_numbers = #tpu.dot_dimension_numbers<[1], [0], [0], [1], [0, 0, 1, 1], [], []>} : vector<128x128xf32>, vector<128x128xf32>, vector<128x128xf32> -> vector<128x128xf32>
      %c0_21 = arith.constant 0 : index
      %c0_22 = arith.constant 0 : index
      %24 = vector.load %arg8[%c0_21, %c0_22] : memref<1x128xf32, #tpu.memory_space<vmem>>, vector<1x128xf32>
      %25 = vector.broadcast %24 : vector<1x128xf32> to vector<128x128xf32>
      %26 = arith.addf %23, %25 : vector<128x128xf32>
      %cst_23 = arith.constant 0.000000e+00 : f32
      %27 = vector.broadcast %cst_23 : f32 to vector<128x128xf32>
      %28 = arith.maximumf %26, %27 : vector<128x128xf32>
      %c0_24 = arith.constant 0 : index
      %c0_25 = arith.constant 0 : index
      %29 = vector.load %arg9[%c0_24, %c0_25] : memref<128x128xf32, #tpu.memory_space<vmem>>, vector<128x128xf32>
      %cst_26 = arith.constant dense<0.000000e+00> : vector<128x128xf32>
      %30 = tpu.matmul %28, %29, %cst_26 {dimension_numbers = #tpu.dot_dimension_numbers<[1], [0], [0], [1], [0, 0, 1, 1], [], []>} : vector<128x128xf32>, vector<128x128xf32>, vector<128x128xf32> -> vector<128x128xf32>
      %c0_27 = arith.constant 0 : index
      %c0_28 = arith.constant 0 : index
      %31 = vector.load %arg10[%c0_27, %c0_28] : memref<1x128xf32, #tpu.memory_space<vmem>>, vector<1x128xf32>
      %32 = vector.broadcast %31 : vector<1x128xf32> to vector<128x128xf32>
      %33 = arith.addf %30, %32 : vector<128x128xf32>
      %cst_29 = arith.constant 0.000000e+00 : f32
      %34 = vector.broadcast %cst_29 : f32 to vector<128x128xf32>
      %35 = arith.maximumf %33, %34 : vector<128x128xf32>
      %c0_30 = arith.constant 0 : index
      %c0_31 = arith.constant 0 : index
      %36 = vector.load %arg11[%c0_30, %c0_31] : memref<128x128xf32, #tpu.memory_space<vmem>>, vector<128x128xf32>
      %cst_32 = arith.constant dense<0.000000e+00> : vector<128x128xf32>
      %37 = tpu.matmul %35, %36, %cst_32 {dimension_numbers = #tpu.dot_dimension_numbers<[1], [0], [0], [1], [0, 0, 1, 1], [], []>} : vector<128x128xf32>, vector<128x128xf32>, vector<128x128xf32> -> vector<128x128xf32>
      %c0_33 = arith.constant 0 : index
      %c0_34 = arith.constant 0 : index
      %38 = vector.load %arg12[%c0_33, %c0_34] : memref<1x128xf32, #tpu.memory_space<vmem>>, vector<1x128xf32>
      %39 = vector.broadcast %38 : vector<1x128xf32> to vector<128x128xf32>
      %40 = arith.addf %37, %39 : vector<128x128xf32>
      %c0_35 = arith.constant 0 : index
      %c0_36 = arith.constant 0 : index
      %41 = vector.load %arg13[%c0_35, %c0_36] : memref<128x128xf32, #tpu.memory_space<vmem>>, vector<128x128xf32>
      tpu.vector_store %arg13[%c0_35, %c0_36], %40 {strides = array<i32>} : memref<128x128xf32, #tpu.memory_space<vmem>>, vector<128x128xf32>,
    } else {
    }
    return
  }
  func.func @transform_0(%arg0: i32, %arg1: i32) -> (i32, i32) {
    %c0_i32 = arith.constant 0 : i32
    %c0_i32_0 = arith.constant 0 : i32
    %c0_i32_1 = arith.constant 0 : i32
    return %c0_i32, %c0_i32_0 : i32, i32
  }
  func.func @transform_1(%arg0: i32, %arg1: i32) -> (i32, i32) {
    %c0_i32 = arith.constant 0 : i32
    return %arg0, %arg1 : i32, i32
  }
  func.func @transform_2(%arg0: i32, %arg1: i32) -> (i32, i32) {
    %c0_i32 = arith.constant 0 : i32
    %c0_i32_0 = arith.constant 0 : i32
    return %arg1, %c0_i32 : i32, i32
  }
  func.func @transform_3(%arg0: i32, %arg1: i32) -> (i32, i32) {
    %c0_i32 = arith.constant 0 : i32
    %c0_i32_0 = arith.constant 0 : i32
    return %arg0, %c0_i32 : i32, i32
  }
  func.func @transform_4(%arg0: i32, %arg1: i32) -> (i32, i32) {
    %c0_i32 = arith.constant 0 : i32
    %c0_i32_0 = arith.constant 0 : i32
    return %arg0, %c0_i32 : i32, i32
  }
  func.func @transform_5(%arg0: i32, %arg1: i32) -> (i32, i32) {
    %c0_i32 = arith.constant 0 : i32
    %c0_i32_0 = arith.constant 0 : i32
    %c0_i32_1 = arith.constant 0 : i32
    return %c0_i32, %c0_i32_0 : i32, i32
  }
  func.func @transform_6(%arg0: i32, %arg1: i32) -> (i32, i32) {
    %c0_i32 = arith.constant 0 : i32
    %c0_i32_0 = arith.constant 0 : i32
    %c0_i32_1 = arith.constant 0 : i32
    return %c0_i32, %c0_i32_0 : i32, i32
  }
  func.func @transform_7(%arg0: i32, %arg1: i32) -> (i32, i32) {
    %c0_i32 = arith.constant 0 : i32
    %c0_i32_0 = arith.constant 0 : i32
    %c0_i32_1 = arith.constant 0 : i32
    return %c0_i32, %c0_i32_0 : i32, i32
  }
  func.func @transform_8(%arg0: i32, %arg1: i32) -> (i32, i32) {
    %c0_i32 = arith.constant 0 : i32
    %c0_i32_0 = arith.constant 0 : i32
    %c0_i32_1 = arith.constant 0 : i32
    return %c0_i32, %c0_i32_0 : i32, i32
  }
  func.func @transform_9(%arg0: i32, %arg1: i32) -> (i32, i32) {
    %c0_i32 = arith.constant 0 : i32
    %c0_i32_0 = arith.constant 0 : i32
    %c0_i32_1 = arith.constant 0 : i32
    return %c0_i32, %c0_i32_0 : i32, i32
  }
  func.func @transform_10(%arg0: i32, %arg1: i32) -> (i32, i32) {
    %c0_i32 = arith.constant 0 : i32
    %c0_i32_0 = arith.constant 0 : i32
    %c0_i32_1 = arith.constant 0 : i32
    return %c0_i32, %c0_i32_0 : i32, i32
  }
  func.func @transform_11(%arg0: i32, %arg1: i32) -> (i32, i32) {
    %c0_i32 = arith.constant 0 : i32
    %c0_i32_0 = arith.constant 0 : i32
    return %arg0, %c0_i32 : i32, i32
  }
}

</mosaic_0001>

<llo_original>
// kernel: tpu_custom_call.1
$region0: #{tpu_custom_call.1}
  #allocation0 [shape = 'u32[]', space=smem, size = 0x4, offset = 0x4, fixed_abs, tag = 'smem constant byte address 0x4 - core index']
  #allocation1 [shape = 'u32[144,128]{1,0:T(1,128)}', space=vmem, size = 0x12000, scoped, tag = 'internal scratch']
  #allocation2 [shape = 'f32[128,128]{1,0:T(8,128)}', space=vmem, size = 0x10000, scoped, tag = 'scratch operand']
  #allocation3 [shape = 'f32[1,1]{1,0:T(1,128)S(6)}', space=smem, size = 0x200, scoped, tag = 'scoped memory for tpu_custom_call.1']
  %s0 = inlined_call_operand.<no memory space> [shape: f32[1,1], index: 0, kind: input, shape index: {}]
  %s1 = inlined_call_operand.hbm [shape: bf16[128,128], index: 1, kind: input, shape index: {}]
  %s2 = inlined_call_operand.hbm [shape: bf16[128,128], index: 2, kind: input, shape index: {}]
  %s3 = inlined_call_operand.hbm [shape: bf16[128,128], index: 3, kind: input, shape index: {}]
  %s4 = inlined_call_operand.vmem [shape: f32[128,1], index: 4, kind: input, shape index: {}]
  %s5 = inlined_call_operand.vmem [shape: f32[128,128], index: 5, kind: input, shape index: {}]
  %s6 = inlined_call_operand.vmem [shape: f32[1,128], index: 6, kind: input, shape index: {}]
  %s7 = inlined_call_operand.hbm [shape: f32[128,128], index: 7, kind: input, shape index: {}]
  %s8 = inlined_call_operand.vmem [shape: f32[1,128], index: 8, kind: input, shape index: {}]
  %s9 = inlined_call_operand.hbm [shape: f32[128,128], index: 9, kind: input, shape index: {}]
  %s10 = inlined_call_operand.vmem [shape: f32[1,128], index: 10, kind: input, shape index: {}]
  %s11 = inlined_call_operand.hbm [shape: f32[128,128], index: 11, kind: output, shape index: {}]
  %s12 = sld [smem:[#allocation0]]
  $region82: #{tpu_custom_call.1} parent=0
    _
  %s14 = ssub.s32 1, %s12
  %s15 = scalar_select 0, %s14, %s12
  %16 = sst [smem:[#allocation3]] %s0
  $region1: #{tpu_custom_call.1} parent=0
    #allocation4 [shape = 'u8[32768]{0}', space=vmem, size = 0x8000, scoped, tag = 'input window, operand 1, single buffered']
    #allocation5 [shape = 's32[1]{0}', space=sflag, size = 0x4, scoped, tag = 'scoped memory for tpu_custom_call.1']
    #allocation6 [shape = 's32[1]{0}', space=sflag, size = 0x4, scoped, tag = 'scoped memory for tpu_custom_call.1']
    #allocation7 [shape = 'u8[32768]{0}', space=vmem, size = 0x8000, scoped, tag = 'input window, operand 2, single buffered']
    #allocation8 [shape = 's32[1]{0}', space=sflag, size = 0x4, scoped, tag = 'scoped memory for tpu_custom_call.1']
    #allocation9 [shape = 'u8[32768]{0}', space=vmem, size = 0x8000, scoped, tag = 'input window, operand 3, single buffered']
    #allocation10 [shape = 'u8[65536]{0}', space=vmem, size = 0x10000, scoped, tag = 'input window, operand 7, single buffered']
    #allocation11 [shape = 's32[1]{0}', space=sflag, size = 0x4, scoped, tag = 'scoped memory for tpu_custom_call.1']
    #allocation12 [shape = 'u8[65536]{0}', space=vmem, size = 0x10000, scoped, tag = 'input window, operand 9, single buffered']
    #allocation13 [shape = 'u8[65536]{0}', space=vmem, size = 0x10000, scoped, tag = 'output window, operand 0, single buffered']
    %17 = vsyncpa [#allocation5], 0
    %18 = vsyncpa [#allocation8], 0
    %19 = vsyncpa [#allocation11], 0
    %20 = vsyncpa [#allocation6], 0
    // Predicated region
    $region2: #{tpu_custom_call.1} parent=1 // pred_check
      _
    $region3: #{tpu_custom_call.1} parent=1 // pred_check_branch
      %22 = sbr.rel (0) target = $region5
    $region4: #{tpu_custom_call.1} parent=1 // pred_region
      _
    $region5: #{tpu_custom_call.1} parent=1 // pred_fallthru
      _
    // Predicated region
    $region6: #{tpu_custom_call.1} parent=1 // pred_check
      _
    $region7: #{tpu_custom_call.1} parent=1 // pred_check_branch
      %24 = sbr.rel (0) target = $region9
    $region8: #{tpu_custom_call.1} parent=1 // pred_region
      %s26 = ssub.s32 1024, 1024
      %27 = vsyncadd [#allocation5], %s26
      %s28 = sshll.u32 [#allocation4], 4
      %s29 = int_to_ptr.vmem [resolvable:$true] %s28
      %34 = dma.hbm_to_vmem [thread:$0]  %s1, 1024, %s29, [#allocation5], 64, 64, 4
    $region9: #{tpu_custom_call.1} parent=1 // pred_fallthru
      _
    // Predicated region
    $region10: #{tpu_custom_call.1} parent=1 // pred_check
      _
    $region11: #{tpu_custom_call.1} parent=1 // pred_check_branch
      %36 = sbr.rel (0) target = $region13
    $region12: #{tpu_custom_call.1} parent=1 // pred_region
      %s38 = ssub.s32 1024, 1024
      %39 = vsyncadd [#allocation8], %s38
      %s40 = sshll.u32 [#allocation7], 4
      %s41 = int_to_ptr.vmem [resolvable:$true] %s40
      %46 = dma.hbm_to_vmem [thread:$0]  %s2, 1024, %s41, [#allocation8], 64, 64, 4
    $region13: #{tpu_custom_call.1} parent=1 // pred_fallthru
      _
    // Predicated region
    $region14: #{tpu_custom_call.1} parent=1 // pred_check
      _
    $region15: #{tpu_custom_call.1} parent=1 // pred_check_branch
      %48 = sbr.rel (0) target = $region17
    $region16: #{tpu_custom_call.1} parent=1 // pred_region
      %s50 = ssub.s32 1024, 1024
      %51 = vsyncadd [#allocation8], %s50
      %s52 = sshll.u32 [#allocation9], 4
      %s53 = int_to_ptr.vmem [resolvable:$true] %s52
      %58 = dma.hbm_to_vmem [thread:$0]  %s3, 1024, %s53, [#allocation8], 64, 64, 4
    $region17: #{tpu_custom_call.1} parent=1 // pred_fallthru
      _
    // Predicated region
    $region18: #{tpu_custom_call.1} parent=1 // pred_check
      _
    $region19: #{tpu_custom_call.1} parent=1 // pred_check_branch
      %60 = sbr.rel (0) target = $region21
    $region20: #{tpu_custom_call.1} parent=1 // pred_region
      _
    $region21: #{tpu_custom_call.1} parent=1 // pred_fallthru
      _
    // Predicated region
    $region22: #{tpu_custom_call.1} parent=1 // pred_check
      _
    $region23: #{tpu_custom_call.1} parent=1 // pred_check_branch
      %62 = sbr.rel (0) target = $region25
    $region24: #{tpu_custom_call.1} parent=1 // pred_region
      _
    $region25: #{tpu_custom_call.1} parent=1 // pred_fallthru
      _
    // Predicated region
    $region26: #{tpu_custom_call.1} parent=1 // pred_check
      _
    $region27: #{tpu_custom_call.1} parent=1 // pred_check_branch
      %64 = sbr.rel (0) target = $region29
    $region28: #{tpu_custom_call.1} parent=1 // pred_region
      _
    $region29: #{tpu_custom_call.1} parent=1 // pred_fallthru
      _
    // Predicated region
    $region30: #{tpu_custom_call.1} parent=1 // pred_check
      _
    $region31: #{tpu_custom_call.1} parent=1 // pred_check_branch
      %66 = sbr.rel (0) target = $region33
    $region32: #{tpu_custom_call.1} parent=1 // pred_region
      %s68 = ssub.s32 2048, 2048
      %69 = vsyncadd [#allocation11], %s68
      %s70 = sshll.u32 [#allocation10], 4
      %s71 = int_to_ptr.vmem [resolvable:$true] %s70
      %76 = dma.hbm_to_vmem [thread:$0]  %s7, 2048, %s71, [#allocation11], 128, 128, 8
    $region33: #{tpu_custom_call.1} parent=1 // pred_fallthru
      _
    // Predicated region
    $region34: #{tpu_custom_call.1} parent=1 // pred_check
      _
    $region35: #{tpu_custom_call.1} parent=1 // pred_check_branch
      %78 = sbr.rel (0) target = $region37
    $region36: #{tpu_custom_call.1} parent=1 // pred_region
      _
    $region37: #{tpu_custom_call.1} parent=1 // pred_fallthru
      _
    // Predicated region
    $region38: #{tpu_custom_call.1} parent=1 // pred_check
      _
    $region39: #{tpu_custom_call.1} parent=1 // pred_check_branch
      %80 = sbr.rel (0) target = $region41
    $region40: #{tpu_custom_call.1} parent=1 // pred_region
      %s82 = ssub.s32 2048, 2048
      %83 = vsyncadd [#allocation11], %s82
      %s84 = sshll.u32 [#allocation12], 4
      %s85 = int_to_ptr.vmem [resolvable:$true] %s84
      %90 = dma.hbm_to_vmem [thread:$0]  %s9, 2048, %s85, [#allocation11], 128, 128, 8
    $region41: #{tpu_custom_call.1} parent=1 // pred_fallthru
      _
    // Predicated region
    $region42: #{tpu_custom_call.1} parent=1 // pred_check
      _
    $region43: #{tpu_custom_call.1} parent=1 // pred_check_branch
      %92 = sbr.rel (0) target = $region45
    $region44: #{tpu_custom_call.1} parent=1 // pred_region
      _
    $region45: #{tpu_custom_call.1} parent=1 // pred_fallthru
      _
    // Predicated region
    $region46: #{tpu_custom_call.1} parent=1 // pred_check
      _
    $region47: #{tpu_custom_call.1} parent=1 // pred_check_branch
      %94 = sbr.rel (0) target = $region49
    $region48: #{tpu_custom_call.1} parent=1 // pred_region
      %95 = dma.done [#allocation5], 1024
    $region49: #{tpu_custom_call.1} parent=1 // pred_fallthru
      _
    // Predicated region
    $region50: #{tpu_custom_call.1} parent=1 // pred_check
      _
    $region51: #{tpu_custom_call.1} parent=1 // pred_check_branch
      %97 = sbr.rel (0) target = $region53
    $region52: #{tpu_custom_call.1} parent=1 // pred_region
      %98 = dma.done [#allocation8], 1024
    $region53: #{tpu_custom_call.1} parent=1 // pred_fallthru
      _
    // Predicated region
    $region54: #{tpu_custom_call.1} parent=1 // pred_check
      _
    $region55: #{tpu_custom_call.1} parent=1 // pred_check_branch
      %100 = sbr.rel (0) target = $region57
    $region56: #{tpu_custom_call.1} parent=1 // pred_region
      %101 = dma.done [#allocation8], 1024
    $region57: #{tpu_custom_call.1} parent=1 // pred_fallthru
      _
    // Predicated region
    $region58: #{tpu_custom_call.1} parent=1 // pred_check
      _
    $region59: #{tpu_custom_call.1} parent=1 // pred_check_branch
      %103 = sbr.rel (0) target = $region61
    $region60: #{tpu_custom_call.1} parent=1 // pred_region
      %104 = dma.done [#allocation11], 2048
    $region61: #{tpu_custom_call.1} parent=1 // pred_fallthru
      _
    // Predicated region
    $region62: #{tpu_custom_call.1} parent=1 // pred_check
      _
    $region63: #{tpu_custom_call.1} parent=1 // pred_check_branch
      %106 = sbr.rel (0) target = $region65
    $region64: #{tpu_custom_call.1} parent=1 // pred_region
      %107 = dma.done [#allocation11], 2048
    $region65: #{tpu_custom_call.1} parent=1 // pred_fallthru
      _
    %p109 = scmp.eq.s32.totalorder 0, 0
    // Predicated region
    $region66: #{tpu_custom_call.1} parent=1 // pred_check
      %p110 = pneg %p109
    $region67: #{tpu_custom_call.1} parent=1 // pred_check_branch
      %112 = sbr.rel (%p110) target = $region69
    $region68: #{tpu_custom_call.1} parent=1 // pred_region
      %113 = vst [vmem:[#allocation2] sm:$0xff] 0.0
      %114 = vst [vmem:[#allocation2 + $0x8] sm:$0xff] 0.0
      %115 = vst [vmem:[#allocation2 + $0x10] sm:$0xff] 0.0
      %116 = vst [vmem:[#allocation2 + $0x18] sm:$0xff] 0.0
      %117 = vst [vmem:[#allocation2 + $0x20] sm:$0xff] 0.0
      %118 = vst [vmem:[#allocation2 + $0x28] sm:$0xff] 0.0
      %119 = vst [vmem:[#allocation2 + $0x30] sm:$0xff] 0.0
      %120 = vst [vmem:[#allocation2 + $0x38] sm:$0xff] 0.0
      %121 = vst [vmem:[#allocation2 + $0x40] sm:$0xff] 0.0
      %122 = vst [vmem:[#allocation2 + $0x48] sm:$0xff] 0.0
      %123 = vst [vmem:[#allocation2 + $0x50] sm:$0xff] 0.0
      %124 = vst [vmem:[#allocation2 + $0x58] sm:$0xff] 0.0
      %125 = vst [vmem:[#allocation2 + $0x60] sm:$0xff] 0.0
      %126 = vst [vmem:[#allocation2 + $0x68] sm:$0xff] 0.0
      %127 = vst [vmem:[#allocation2 + $0x70] sm:$0xff] 0.0
      %128 = vst [vmem:[#allocation2 + $0x78] sm:$0xff] 0.0
    $region69: #{tpu_custom_call.1} parent=1 // pred_fallthru
      _
    %v129 = vld [vmem:[#allocation2] sm:$0xff]
    %v130 = vld [vmem:[#allocation2 + $0x8] sm:$0xff]
    %v131 = vld [vmem:[#allocation2 + $0x10] sm:$0xff]
    %v132 = vld [vmem:[#allocation2 + $0x18] sm:$0xff]
    %v133 = vld [vmem:[#allocation2 + $0x20] sm:$0xff]
    %v134 = vld [vmem:[#allocation2 + $0x28] sm:$0xff]
    %v135 = vld [vmem:[#allocation2 + $0x30] sm:$0xff]
    %v136 = vld [vmem:[#allocation2 + $0x38] sm:$0xff]
    %v137 = vld [vmem:[#allocation2 + $0x40] sm:$0xff]
    %v138 = vld [vmem:[#allocation2 + $0x48] sm:$0xff]
    %v139 = vld [vmem:[#allocation2 + $0x50] sm:$0xff]
    %v140 = vld [vmem:[#allocation2 + $0x58] sm:$0xff]
    %v141 = vld [vmem:[#allocation2 + $0x60] sm:$0xff]
    %v142 = vld [vmem:[#allocation2 + $0x68] sm:$0xff]
    %v143 = vld [vmem:[#allocation2 + $0x70] sm:$0xff]
    %v144 = vld [vmem:[#allocation2 + $0x78] sm:$0xff]
    %v145 = vld [vmem:[#allocation4] sm:$0xf]
    %v146 = vld [vmem:[#allocation4 + $0x4] sm:$0xf]
    %v147 = vld [vmem:[#allocation4 + $0x8] sm:$0xf]
    %v148 = vld [vmem:[#allocation4 + $0xc] sm:$0xf]
    %v149 = vld [vmem:[#allocation4 + $0x10] sm:$0xf]
    %v150 = vld [vmem:[#allocation4 + $0x14] sm:$0xf]
    %v151 = vld [vmem:[#allocation4 + $0x18] sm:$0xf]
    %v152 = vld [vmem:[#allocation4 + $0x1c] sm:$0xf]
    %v153 = vld [vmem:[#allocation4 + $0x20] sm:$0xf]
    %v154 = vld [vmem:[#allocation4 + $0x24] sm:$0xf]
    %v155 = vld [vmem:[#allocation4 + $0x28] sm:$0xf]
    %v156 = vld [vmem:[#allocation4 + $0x2c] sm:$0xf]
    %v157 = vld [vmem:[#allocation4 + $0x30] sm:$0xf]
    %v158 = vld [vmem:[#allocation4 + $0x34] sm:$0xf]
    %v159 = vld [vmem:[#allocation4 + $0x38] sm:$0xf]
    %v160 = vld [vmem:[#allocation4 + $0x3c] sm:$0xf]
    %v161 = vld [vmem:[#allocation7] sm:$0xf]
    %v162 = vld [vmem:[#allocation7 + $0x4] sm:$0xf]
    %v163 = vld [vmem:[#allocation7 + $0x8] sm:$0xf]
    %v164 = vld [vmem:[#allocation7 + $0xc] sm:$0xf]
    %v165 = vld [vmem:[#allocation7 + $0x10] sm:$0xf]
    %v166 = vld [vmem:[#allocation7 + $0x14] sm:$0xf]
    %v167 = vld [vmem:[#allocation7 + $0x18] sm:$0xf]
    %v168 = vld [vmem:[#allocation7 + $0x1c] sm:$0xf]
    %v169 = vld [vmem:[#allocation7 + $0x20] sm:$0xf]
    %v170 = vld [vmem:[#allocation7 + $0x24] sm:$0xf]
    %v171 = vld [vmem:[#allocation7 + $0x28] sm:$0xf]
    %v172 = vld [vmem:[#allocation7 + $0x2c] sm:$0xf]
    %v173 = vld [vmem:[#allocation7 + $0x30] sm:$0xf]
    %v174 = vld [vmem:[#allocation7 + $0x34] sm:$0xf]
    %v175 = vld [vmem:[#allocation7 + $0x38] sm:$0xf]
    %v176 = vld [vmem:[#allocation7 + $0x3c] sm:$0xf]
    %v193 = vunpack.c.l.b16 %v145
    %v194 = vunpack.c.l.b16 %v146
    %v195 = vunpack.c.l.b16 %v147
    %v196 = vunpack.c.l.b16 %v148
    %v197 = vunpack.c.l.b16 %v149
    %v198 = vunpack.c.l.b16 %v150
    %v199 = vunpack.c.l.b16 %v151
    %v200 = vunpack.c.l.b16 %v152
    %v201 = vunpack.c.l.b16 %v153
    %v202 = vunpack.c.l.b16 %v154
    %v203 = vunpack.c.l.b16 %v155
    %v204 = vunpack.c.l.b16 %v156
    %v205 = vunpack.c.l.b16 %v157
    %v206 = vunpack.c.l.b16 %v158
    %v207 = vunpack.c.l.b16 %v159
    %v208 = vunpack.c.l.b16 %v160
    %v209 = vpack.c.b16 %v194, %v193
    %v210 = vpack.c.b16 %v196, %v195
    %v211 = vpack.c.b16 %v198, %v197
    %v212 = vpack.c.b16 %v200, %v199
    %v213 = vpack.c.b16 %v202, %v201
    %v214 = vpack.c.b16 %v204, %v203
    %v215 = vpack.c.b16 %v206, %v205
    %v216 = vpack.c.b16 %v208, %v207
    %v241 = vunpack.c.l.b16 %v161
    %v242 = vunpack.c.l.b16 %v162
    %v243 = vunpack.c.l.b16 %v163
    %v244 = vunpack.c.l.b16 %v164
    %v245 = vunpack.c.l.b16 %v165
    %v246 = vunpack.c.l.b16 %v166
    %v247 = vunpack.c.l.b16 %v167
    %v248 = vunpack.c.l.b16 %v168
    %v249 = vunpack.c.l.b16 %v169
    %v250 = vunpack.c.l.b16 %v170
    %v251 = vunpack.c.l.b16 %v171
    %v252 = vunpack.c.l.b16 %v172
    %v253 = vunpack.c.l.b16 %v173
    %v254 = vunpack.c.l.b16 %v174
    %v255 = vunpack.c.l.b16 %v175
    %v256 = vunpack.c.l.b16 %v176
    %v257 = vpack.c.b16 %v242, %v241
    %v258 = vpack.c.b16 %v244, %v243
    %v259 = vpack.c.b16 %v246, %v245
    %v260 = vpack.c.b16 %v248, %v247
    %v261 = vpack.c.b16 %v250, %v249
    %v262 = vpack.c.b16 %v252, %v251
    %v263 = vpack.c.b16 %v254, %v253
    %v264 = vpack.c.b16 %v256, %v255
    %273 = vmatprep.subr.bf16.mxu0 0
    %274 = vmatpush1.bf16.msra.mxu0 %v257
    %275 = vmatprep.subr.bf16.mxu0 0
    %276 = vmatpush1.bf16.msra.mxu0 %v258
    %277 = vmatprep.subr.bf16.mxu0 0
    %278 = vmatpush1.bf16.msra.mxu0 %v259
    %279 = vmatprep.subr.bf16.mxu0 0
    %280 = vmatpush1.bf16.msra.mxu0 %v260
    %281 = vmatprep.subr.bf16.mxu0 0
    %282 = vmatpush1.bf16.msra.mxu0 %v261
    %283 = vmatprep.subr.bf16.mxu0 0
    %284 = vmatpush1.bf16.msra.mxu0 %v262
    %285 = vmatprep.subr.bf16.mxu0 0
    %286 = vmatpush1.bf16.msra.mxu0 %v263
    %287 = vmatprep.subr.bf16.mxu0 0
    %288 = vmatpush1.bf16.msra.mxu0 %v264
    %289 = vmatprep.subr.bf16.mxu0 0
    %290 = vmatpush1.bf16.msra.mxu0 0
    %291 = vmatprep.subr.bf16.mxu0 0
    %292 = vmatpush1.bf16.msra.mxu0 0
    %293 = vmatprep.subr.bf16.mxu0 0
    %294 = vmatpush1.bf16.msra.mxu0 0
    %295 = vmatprep.subr.bf16.mxu0 0
    %296 = vmatpush1.bf16.msra.mxu0 0
    %297 = vmatprep.subr.bf16.mxu0 0
    %298 = vmatpush1.bf16.msra.mxu0 0
    %299 = vmatprep.subr.bf16.mxu0 0
    %300 = vmatpush1.bf16.msra.mxu0 0
    %301 = vmatprep.subr.bf16.mxu0 0
    %302 = vmatpush1.bf16.msra.mxu0 0
    %303 = vmatprep.subr.bf16.mxu0 0
    %304 = vmatpush1.bf16.msra.mxu0 0
    %305 = vmatprep.mubr.bf16.mxu0 0
    %306 = vmatmul.mubr.bf16.gmra.mrb[0].mxu0 %v209
    %v307 = vpop.f32.mrb[0].mxu0
    %v308 = vadd.f32 0.0, %v307
    %v309 = vpop.f32.mrb[0].mxu0
    %v310 = vpop.f32.mrb[0].mxu0
    %v311 = vadd.f32 0.0, %v310
    %v312 = vpop.f32.mrb[0].mxu0
    %313 = vmatprep.mubr.bf16.mxu0 0
    %314 = vmatmul.mubr.bf16.gmra.mrb[0].mxu0 %v210
    %v315 = vpop.f32.mrb[0].mxu0
    %v316 = vadd.f32 0.0, %v315
    %v317 = vpop.f32.mrb[0].mxu0
    %v318 = vpop.f32.mrb[0].mxu0
    %v319 = vadd.f32 0.0, %v318
    %v320 = vpop.f32.mrb[0].mxu0
    %321 = vmatprep.mubr.bf16.mxu0 0
    %322 = vmatmul.mubr.bf16.gmra.mrb[0].mxu0 %v211
    %v323 = vpop.f32.mrb[0].mxu0
    %v324 = vadd.f32 0.0, %v323
    %v325 = vpop.f32.mrb[0].mxu0
    %v326 = vpop.f32.mrb[0].mxu0
    %v327 = vadd.f32 0.0, %v326
    %v328 = vpop.f32.mrb[0].mxu0
    %329 = vmatprep.mubr.bf16.mxu0 0
    %330 = vmatmul.mubr.bf16.gmra.mrb[0].mxu0 %v212
    %v331 = vpop.f32.mrb[0].mxu0
    %v332 = vadd.f32 0.0, %v331
    %v333 = vpop.f32.mrb[0].mxu0
    %v334 = vpop.f32.mrb[0].mxu0
    %v335 = vadd.f32 0.0, %v334
    %v336 = vpop.f32.mrb[0].mxu0
    %337 = vmatprep.mubr.bf16.mxu0 0
    %338 = vmatmul.mubr.bf16.gmra.mrb[0].mxu0 %v213
    %v339 = vpop.f32.mrb[0].mxu0
    %v340 = vadd.f32 0.0, %v339
    %v341 = vpop.f32.mrb[0].mxu0
    %v342 = vpop.f32.mrb[0].mxu0
    %v343 = vadd.f32 0.0, %v342
    %v344 = vpop.f32.mrb[0].mxu0
    %345 = vmatprep.mubr.bf16.mxu0 0
    %346 = vmatmul.mubr.bf16.gmra.mrb[0].mxu0 %v214
    %v347 = vpop.f32.mrb[0].mxu0
    %v348 = vadd.f32 0.0, %v347
    %v349 = vpop.f32.mrb[0].mxu0
    %v350 = vpop.f32.mrb[0].mxu0
    %v351 = vadd.f32 0.0, %v350
    %v352 = vpop.f32.mrb[0].mxu0
    %353 = vmatprep.mubr.bf16.mxu0 0
    %354 = vmatmul.mubr.bf16.gmra.mrb[0].mxu0 %v215
    %v355 = vpop.f32.mrb[0].mxu0
    %v356 = vadd.f32 0.0, %v355
    %v357 = vpop.f32.mrb[0].mxu0
    %v358 = vpop.f32.mrb[0].mxu0
    %v359 = vadd.f32 0.0, %v358
    %v360 = vpop.f32.mrb[0].mxu0
    %361 = vmatprep.mubr.bf16.mxu0 0
    %362 = vmatmul.mubr.bf16.gmra.mrb[0].mxu0 %v216
    %v363 = vpop.f32.mrb[0].mxu0
    %v364 = vadd.f32 0.0, %v363
    %v365 = vpop.f32.mrb[0].mxu0
    %v366 = vpop.f32.mrb[0].mxu0
    %v367 = vadd.f32 0.0, %v366
    %v368 = vpop.f32.mrb[0].mxu0
    %369 = vdwg.mxu0
    %v370 = vadd.f32 %v129, %v308
    %v371 = vadd.f32 %v130, %v311
    %v372 = vadd.f32 %v131, %v316
    %v373 = vadd.f32 %v132, %v319
    %v374 = vadd.f32 %v133, %v324
    %v375 = vadd.f32 %v134, %v327
    %v376 = vadd.f32 %v135, %v332
    %v377 = vadd.f32 %v136, %v335
    %v378 = vadd.f32 %v137, %v340
    %v379 = vadd.f32 %v138, %v343
    %v380 = vadd.f32 %v139, %v348
    %v381 = vadd.f32 %v140, %v351
    %v382 = vadd.f32 %v141, %v356
    %v383 = vadd.f32 %v142, %v359
    %v384 = vadd.f32 %v143, %v364
    %v385 = vadd.f32 %v144, %v367
    %386 = vst [vmem:[#allocation2] sm:$0xff] %v370
    %387 = vst [vmem:[#allocation2 + $0x8] sm:$0xff] %v371
    %388 = vst [vmem:[#allocation2 + $0x10] sm:$0xff] %v372
    %389 = vst [vmem:[#allocation2 + $0x18] sm:$0xff] %v373
    %390 = vst [vmem:[#allocation2 + $0x20] sm:$0xff] %v374
    %391 = vst [vmem:[#allocation2 + $0x28] sm:$0xff] %v375
    %392 = vst [vmem:[#allocation2 + $0x30] sm:$0xff] %v376
    %393 = vst [vmem:[#allocation2 + $0x38] sm:$0xff] %v377
    %394 = vst [vmem:[#allocation2 + $0x40] sm:$0xff] %v378
    %395 = vst [vmem:[#allocation2 + $0x48] sm:$0xff] %v379
    %396 = vst [vmem:[#allocation2 + $0x50] sm:$0xff] %v380
    %397 = vst [vmem:[#allocation2 + $0x58] sm:$0xff] %v381
    %398 = vst [vmem:[#allocation2 + $0x60] sm:$0xff] %v382
    %399 = vst [vmem:[#allocation2 + $0x68] sm:$0xff] %v383
    %400 = vst [vmem:[#allocation2 + $0x70] sm:$0xff] %v384
    %401 = vst [vmem:[#allocation2 + $0x78] sm:$0xff] %v385
    // Predicated region
    $region70: #{tpu_custom_call.1} parent=1 // pred_check
      %p402 = pneg %p109
    $region71: #{tpu_custom_call.1} parent=1 // pred_check_branch
      %404 = sbr.rel (%p402) target = $region73
    $region72: #{tpu_custom_call.1} parent=1 // pred_region
      %s405 = sld [smem:[#allocation3]]
      %v406 = vld [vmem:[#allocation2] sm:$0xff]
      %v407 = vld [vmem:[#allocation2 + $0x8] sm:$0xff]
      %v408 = vld [vmem:[#allocation2 + $0x10] sm:$0xff]
      %v409 = vld [vmem:[#allocation2 + $0x18] sm:$0xff]
      %v410 = vld [vmem:[#allocation2 + $0x20] sm:$0xff]
      %v411 = vld [vmem:[#allocation2 + $0x28] sm:$0xff]
      %v412 = vld [vmem:[#allocation2 + $0x30] sm:$0xff]
      %v413 = vld [vmem:[#allocation2 + $0x38] sm:$0xff]
      %v414 = vld [vmem:[#allocation2 + $0x40] sm:$0xff]
      %v415 = vld [vmem:[#allocation2 + $0x48] sm:$0xff]
      %v416 = vld [vmem:[#allocation2 + $0x50] sm:$0xff]
      %v417 = vld [vmem:[#allocation2 + $0x58] sm:$0xff]
      %v418 = vld [vmem:[#allocation2 + $0x60] sm:$0xff]
      %v419 = vld [vmem:[#allocation2 + $0x68] sm:$0xff]
      %v420 = vld [vmem:[#allocation2 + $0x70] sm:$0xff]
      %v421 = vld [vmem:[#allocation2 + $0x78] sm:$0xff]
      %v422 = vld [vmem:[%s4] sm:$0xff]
      %v423 = vld [vmem:[%s4 + $0x8] sm:$0xff]
      %v424 = vld [vmem:[%s4 + $0x10] sm:$0xff]
      %v425 = vld [vmem:[%s4 + $0x18] sm:$0xff]
      %v426 = vld [vmem:[%s4 + $0x20] sm:$0xff]
      %v427 = vld [vmem:[%s4 + $0x28] sm:$0xff]
      %v428 = vld [vmem:[%s4 + $0x30] sm:$0xff]
      %v429 = vld [vmem:[%s4 + $0x38] sm:$0xff]
      %v430 = vld [vmem:[%s4 + $0x40] sm:$0xff]
      %v431 = vld [vmem:[%s4 + $0x48] sm:$0xff]
      %v432 = vld [vmem:[%s4 + $0x50] sm:$0xff]
      %v433 = vld [vmem:[%s4 + $0x58] sm:$0xff]
      %v434 = vld [vmem:[%s4 + $0x60] sm:$0xff]
      %v435 = vld [vmem:[%s4 + $0x68] sm:$0xff]
      %v436 = vld [vmem:[%s4 + $0x70] sm:$0xff]
      %v437 = vld [vmem:[%s4 + $0x78] sm:$0xff]
      %v438 = vld [vmem:[#allocation9] sm:$0xf]
      %v439 = vld [vmem:[#allocation9 + $0x4] sm:$0xf]
      %v440 = vld [vmem:[#allocation9 + $0x8] sm:$0xf]
      %v441 = vld [vmem:[#allocation9 + $0xc] sm:$0xf]
      %v442 = vld [vmem:[#allocation9 + $0x10] sm:$0xf]
      %v443 = vld [vmem:[#allocation9 + $0x14] sm:$0xf]
      %v444 = vld [vmem:[#allocation9 + $0x18] sm:$0xf]
      %v445 = vld [vmem:[#allocation9 + $0x1c] sm:$0xf]
      %v446 = vld [vmem:[#allocation9 + $0x20] sm:$0xf]
      %v447 = vld [vmem:[#allocation9 + $0x24] sm:$0xf]
      %v448 = vld [vmem:[#allocation9 + $0x28] sm:$0xf]
      %v449 = vld [vmem:[#allocation9 + $0x2c] sm:$0xf]
      %v450 = vld [vmem:[#allocation9 + $0x30] sm:$0xf]
      %v451 = vld [vmem:[#allocation9 + $0x34] sm:$0xf]
      %v452 = vld [vmem:[#allocation9 + $0x38] sm:$0xf]
      %v453 = vld [vmem:[#allocation9 + $0x3c] sm:$0xf]
      %v454 = vunpack.c.l.bf16 %v438
      %v455 = vunpack.c.l.bf16 %v439
      %v456 = vunpack.c.l.bf16 %v440
      %v457 = vunpack.c.l.bf16 %v441
      %v458 = vunpack.c.l.bf16 %v442
      %v459 = vunpack.c.l.bf16 %v443
      %v460 = vunpack.c.l.bf16 %v444
      %v461 = vunpack.c.l.bf16 %v445
      %v462 = vunpack.c.l.bf16 %v446
      %v463 = vunpack.c.l.bf16 %v447
      %v464 = vunpack.c.l.bf16 %v448
      %v465 = vunpack.c.l.bf16 %v449
      %v466 = vunpack.c.l.bf16 %v450
      %v467 = vunpack.c.l.bf16 %v451
      %v468 = vunpack.c.l.bf16 %v452
      %v469 = vunpack.c.l.bf16 %v453
      %471 = vset.pattern.permute.xlu0 0
      %472 = vperm.xlu0 %471, %v422
      %v473 = vpop.permute.xlu0 %472
      %476 = vset.pattern.permute.xlu0 0
      %477 = vperm.xlu0 %476, %v423
      %v478 = vpop.permute.xlu0 %477
      %481 = vset.pattern.permute.xlu0 0
      %482 = vperm.xlu0 %481, %v424
      %v483 = vpop.permute.xlu0 %482
      %486 = vset.pattern.permute.xlu0 0
      %487 = vperm.xlu0 %486, %v425
      %v488 = vpop.permute.xlu0 %487
      %491 = vset.pattern.permute.xlu0 0
      %492 = vperm.xlu0 %491, %v426
      %v493 = vpop.permute.xlu0 %492
      %496 = vset.pattern.permute.xlu0 0
      %497 = vperm.xlu0 %496, %v427
      %v498 = vpop.permute.xlu0 %497
      %501 = vset.pattern.permute.xlu0 0
      %502 = vperm.xlu0 %501, %v428
      %v503 = vpop.permute.xlu0 %502
      %506 = vset.pattern.permute.xlu0 0
      %507 = vperm.xlu0 %506, %v429
      %v508 = vpop.permute.xlu0 %507
      %511 = vset.pattern.permute.xlu0 0
      %512 = vperm.xlu0 %511, %v430
      %v513 = vpop.permute.xlu0 %512
      %516 = vset.pattern.permute.xlu0 0
      %517 = vperm.xlu0 %516, %v431
      %v518 = vpop.permute.xlu0 %517
      %521 = vset.pattern.permute.xlu0 0
      %522 = vperm.xlu0 %521, %v432
      %v523 = vpop.permute.xlu0 %522
      %526 = vset.pattern.permute.xlu0 0
      %527 = vperm.xlu0 %526, %v433
      %v528 = vpop.permute.xlu0 %527
      %531 = vset.pattern.permute.xlu0 0
      %532 = vperm.xlu0 %531, %v434
      %v533 = vpop.permute.xlu0 %532
      %536 = vset.pattern.permute.xlu0 0
      %537 = vperm.xlu0 %536, %v435
      %v538 = vpop.permute.xlu0 %537
      %541 = vset.pattern.permute.xlu0 0
      %542 = vperm.xlu0 %541, %v436
      %v543 = vpop.permute.xlu0 %542
      %546 = vset.pattern.permute.xlu0 0
      %547 = vperm.xlu0 %546, %v437
      %v548 = vpop.permute.xlu0 %547
      %v550 = vmul.f32 %v473, %v454
      %v551 = vmul.f32 %v478, %v455
      %v552 = vmul.f32 %v483, %v456
      %v553 = vmul.f32 %v488, %v457
      %v554 = vmul.f32 %v493, %v458
      %v555 = vmul.f32 %v498, %v459
      %v556 = vmul.f32 %v503, %v460
      %v557 = vmul.f32 %v508, %v461
      %v558 = vmul.f32 %v513, %v462
      %v559 = vmul.f32 %v518, %v463
      %v560 = vmul.f32 %v523, %v464
      %v561 = vmul.f32 %v528, %v465
      %v562 = vmul.f32 %v533, %v466
      %v563 = vmul.f32 %v538, %v467
      %v564 = vmul.f32 %v543, %v468
      %v565 = vmul.f32 %v548, %v469
      %v566 = vstv %s405
      %v567 = vmul.f32 %v566, %v550
      %v568 = vmul.f32 %v566, %v551
      %v569 = vmul.f32 %v566, %v552
      %v570 = vmul.f32 %v566, %v553
      %v571 = vmul.f32 %v566, %v554
      %v572 = vmul.f32 %v566, %v555
      %v573 = vmul.f32 %v566, %v556
      %v574 = vmul.f32 %v566, %v557
      %v575 = vmul.f32 %v566, %v558
      %v576 = vmul.f32 %v566, %v559
      %v577 = vmul.f32 %v566, %v560
      %v578 = vmul.f32 %v566, %v561
      %v579 = vmul.f32 %v566, %v562
      %v580 = vmul.f32 %v566, %v563
      %v581 = vmul.f32 %v566, %v564
      %v582 = vmul.f32 %v566, %v565
      %v583 = vadd.f32 %v406, %v567
      %v584 = vadd.f32 %v407, %v568
      %v585 = vadd.f32 %v408, %v569
      %v586 = vadd.f32 %v409, %v570
      %v587 = vadd.f32 %v410, %v571
      %v588 = vadd.f32 %v411, %v572
      %v589 = vadd.f32 %v412, %v573
      %v590 = vadd.f32 %v413, %v574
      %v591 = vadd.f32 %v414, %v575
      %v592 = vadd.f32 %v415, %v576
      %v593 = vadd.f32 %v416, %v577
      %v594 = vadd.f32 %v417, %v578
      %v595 = vadd.f32 %v418, %v579
      %v596 = vadd.f32 %v419, %v580
      %v597 = vadd.f32 %v420, %v581
      %v598 = vadd.f32 %v421, %v582
      %v599 = vld [vmem:[%s5] sm:$0xff]
      %v600 = vld [vmem:[%s5 + $0x8] sm:$0xff]
      %v601 = vld [vmem:[%s5 + $0x10] sm:$0xff]
      %v602 = vld [vmem:[%s5 + $0x18] sm:$0xff]
      %v603 = vld [vmem:[%s5 + $0x20] sm:$0xff]
      %v604 = vld [vmem:[%s5 + $0x28] sm:$0xff]
      %v605 = vld [vmem:[%s5 + $0x30] sm:$0xff]
      %v606 = vld [vmem:[%s5 + $0x38] sm:$0xff]
      %v607 = vld [vmem:[%s5 + $0x40] sm:$0xff]
      %v608 = vld [vmem:[%s5 + $0x48] sm:$0xff]
      %v609 = vld [vmem:[%s5 + $0x50] sm:$0xff]
      %v610 = vld [vmem:[%s5 + $0x58] sm:$0xff]
      %v611 = vld [vmem:[%s5 + $0x60] sm:$0xff]
      %v612 = vld [vmem:[%s5 + $0x68] sm:$0xff]
      %v613 = vld [vmem:[%s5 + $0x70] sm:$0xff]
      %v614 = vld [vmem:[%s5 + $0x78] sm:$0xff]
      %v615 = vld [vmem:[%s6] sm:$0x1]
      %v617 = vlaneseq
      %v618 = vshrl.u32 %v617, 7
      %v619 = vsub.s32 0, %v618
      %v620 = vrot.slane %v615, %v619
      %622 = vmatprep.subr.mxu0 0.0
      %623 = vmatpush1.msra.mxu0 %v599
      %624 = vmatprep.subr.mxu0 0.0
      %625 = vmatpush1.msra.mxu0 %v600
      %626 = vmatprep.subr.mxu0 0.0
      %627 = vmatpush1.msra.mxu0 %v601
      %628 = vmatprep.subr.mxu0 0.0
      %629 = vmatpush1.msra.mxu0 %v602
      %630 = vmatprep.subr.mxu0 0.0
      %631 = vmatpush1.msra.mxu0 %v603
      %632 = vmatprep.subr.mxu0 0.0
      %633 = vmatpush1.msra.mxu0 %v604
      %634 = vmatprep.subr.mxu0 0.0
      %635 = vmatpush1.msra.mxu0 %v605
      %636 = vmatprep.subr.mxu0 0.0
      %637 = vmatpush1.msra.mxu0 %v606
      %638 = vmatprep.subr.mxu0 0.0
      %639 = vmatpush1.msra.mxu0 %v607
      %640 = vmatprep.subr.mxu0 0.0
      %641 = vmatpush1.msra.mxu0 %v608
      %642 = vmatprep.subr.mxu0 0.0
      %643 = vmatpush1.msra.mxu0 %v609
      %644 = vmatprep.subr.mxu0 0.0
      %645 = vmatpush1.msra.mxu0 %v610
      %646 = vmatprep.subr.mxu0 0.0
      %647 = vmatpush1.msra.mxu0 %v611
      %648 = vmatprep.subr.mxu0 0.0
      %649 = vmatpush1.msra.mxu0 %v612
      %650 = vmatprep.subr.mxu0 0.0
      %651 = vmatpush1.msra.mxu0 %v613
      %652 = vmatprep.subr.mxu0 0.0
      %653 = vmatpush1.msra.mxu0 %v614
      %654 = vmatprep.subr.mxu0 0.0
      %655 = vmatpush1.msra.mxu0 0.0
      %656 = vmatprep.subr.mxu0 0.0
      %657 = vmatpush1.msra.mxu0 0.0
      %658 = vmatprep.subr.mxu0 0.0
      %659 = vmatpush1.msra.mxu0 0.0
      %660 = vmatprep.subr.mxu0 0.0
      %661 = vmatpush1.msra.mxu0 0.0
      %662 = vmatprep.subr.mxu0 0.0
      %663 = vmatpush1.msra.mxu0 0.0
      %664 = vmatprep.subr.mxu0 0.0
      %665 = vmatpush1.msra.mxu0 0.0
      %666 = vmatprep.subr.mxu0 0.0
      %667 = vmatpush1.msra.mxu0 0.0
      %668 = vmatprep.subr.mxu0 0.0
      %669 = vmatpush1.msra.mxu0 0.0
      %670 = vmatprep.subr.mxu0 0.0
      %671 = vmatpush1.msra.mxu0 0.0
      %672 = vmatprep.subr.mxu0 0.0
      %673 = vmatpush1.msra.mxu0 0.0
      %674 = vmatprep.subr.mxu0 0.0
      %675 = vmatpush1.msra.mxu0 0.0
      %676 = vmatprep.subr.mxu0 0.0
      %677 = vmatpush1.msra.mxu0 0.0
      %678 = vmatprep.subr.mxu0 0.0
      %679 = vmatpush1.msra.mxu0 0.0
      %680 = vmatprep.subr.mxu0 0.0
      %681 = vmatpush1.msra.mxu0 0.0
      %682 = vmatprep.subr.mxu0 0.0
      %683 = vmatpush1.msra.mxu0 0.0
      %684 = vmatprep.subr.mxu0 0.0
      %685 = vmatpush1.msra.mxu0 0.0
      %686 = vmatprep.mubr.f32.mxu0 0.0
      %687 = vmatmul.mubr.f32.gmra.mrb[0].mxu0 %v583
      %v688 = vpop.f32.mrb[0].mxu0
      %v689 = vadd.f32 %v620, %v688
      %v690 = vpop.f32.mrb[0].mxu0
      %691 = vmatprep.mubr.f32.mxu0 0.0
      %692 = vmatmul.mubr.f32.gmra.mrb[0].mxu0 %v584
      %v693 = vpop.f32.mrb[0].mxu0
      %v694 = vadd.f32 %v620, %v693
      %v695 = vpop.f32.mrb[0].mxu0
      %696 = vmatprep.mubr.f32.mxu0 0.0
      %697 = vmatmul.mubr.f32.gmra.mrb[0].mxu0 %v585
      %v698 = vpop.f32.mrb[0].mxu0
      %v699 = vadd.f32 %v620, %v698
      %v700 = vpop.f32.mrb[0].mxu0
      %701 = vmatprep.mubr.f32.mxu0 0.0
      %702 = vmatmul.mubr.f32.gmra.mrb[0].mxu0 %v586
      %v703 = vpop.f32.mrb[0].mxu0
      %v704 = vadd.f32 %v620, %v703
      %v705 = vpop.f32.mrb[0].mxu0
      %706 = vmatprep.mubr.f32.mxu0 0.0
      %707 = vmatmul.mubr.f32.gmra.mrb[0].mxu0 %v587
      %v708 = vpop.f32.mrb[0].mxu0
      %v709 = vadd.f32 %v620, %v708
      %v710 = vpop.f32.mrb[0].mxu0
      %711 = vmatprep.mubr.f32.mxu0 0.0
      %712 = vmatmul.mubr.f32.gmra.mrb[0].mxu0 %v588
      %v713 = vpop.f32.mrb[0].mxu0
      %v714 = vadd.f32 %v620, %v713
      %v715 = vpop.f32.mrb[0].mxu0
      %716 = vmatprep.mubr.f32.mxu0 0.0
      %717 = vmatmul.mubr.f32.gmra.mrb[0].mxu0 %v589
      %v718 = vpop.f32.mrb[0].mxu0
      %v719 = vadd.f32 %v620, %v718
      %v720 = vpop.f32.mrb[0].mxu0
      %721 = vmatprep.mubr.f32.mxu0 0.0
      %722 = vmatmul.mubr.f32.gmra.mrb[0].mxu0 %v590
      %v723 = vpop.f32.mrb[0].mxu0
      %v724 = vadd.f32 %v620, %v723
      %v725 = vpop.f32.mrb[0].mxu0
      %726 = vmatprep.mubr.f32.mxu0 0.0
      %727 = vmatmul.mubr.f32.gmra.mrb[0].mxu0 %v591
      %v728 = vpop.f32.mrb[0].mxu0
      %v729 = vadd.f32 %v620, %v728
      %v730 = vpop.f32.mrb[0].mxu0
      %731 = vmatprep.mubr.f32.mxu0 0.0
      %732 = vmatmul.mubr.f32.gmra.mrb[0].mxu0 %v592
      %v733 = vpop.f32.mrb[0].mxu0
      %v734 = vadd.f32 %v620, %v733
      %v735 = vpop.f32.mrb[0].mxu0
      %736 = vmatprep.mubr.f32.mxu0 0.0
      %737 = vmatmul.mubr.f32.gmra.mrb[0].mxu0 %v593
      %v738 = vpop.f32.mrb[0].mxu0
      %v739 = vadd.f32 %v620, %v738
      %v740 = vpop.f32.mrb[0].mxu0
      %741 = vmatprep.mubr.f32.mxu0 0.0
      %742 = vmatmul.mubr.f32.gmra.mrb[0].mxu0 %v594
      %v743 = vpop.f32.mrb[0].mxu0
      %v744 = vadd.f32 %v620, %v743
      %v745 = vpop.f32.mrb[0].mxu0
      %746 = vmatprep.mubr.f32.mxu0 0.0
      %747 = vmatmul.mubr.f32.gmra.mrb[0].mxu0 %v595
      %v748 = vpop.f32.mrb[0].mxu0
      %v749 = vadd.f32 %v620, %v748
      %v750 = vpop.f32.mrb[0].mxu0
      %751 = vmatprep.mubr.f32.mxu0 0.0
      %752 = vmatmul.mubr.f32.gmra.mrb[0].mxu0 %v596
      %v753 = vpop.f32.mrb[0].mxu0
      %v754 = vadd.f32 %v620, %v753
      %v755 = vpop.f32.mrb[0].mxu0
      %756 = vmatprep.mubr.f32.mxu0 0.0
      %757 = vmatmul.mubr.f32.gmra.mrb[0].mxu0 %v597
      %v758 = vpop.f32.mrb[0].mxu0
      %v759 = vadd.f32 %v620, %v758
      %v760 = vpop.f32.mrb[0].mxu0
      %761 = vmatprep.mubr.f32.mxu0 0.0
      %762 = vmatmul.mubr.f32.gmra.mrb[0].mxu0 %v598
      %v763 = vpop.f32.mrb[0].mxu0
      %v764 = vadd.f32 %v620, %v763
      %v765 = vpop.f32.mrb[0].mxu0
      %766 = vdwg.mxu0
      %v767 = vmax.f32 %v689, 0.0
      %v768 = vmax.f32 %v694, 0.0
      %v769 = vmax.f32 %v699, 0.0
      %v770 = vmax.f32 %v704, 0.0
      %v771 = vmax.f32 %v709, 0.0
      %v772 = vmax.f32 %v714, 0.0
      %v773 = vmax.f32 %v719, 0.0
      %v774 = vmax.f32 %v724, 0.0
      %v775 = vmax.f32 %v729, 0.0
      %v776 = vmax.f32 %v734, 0.0
      %v777 = vmax.f32 %v739, 0.0
      %v778 = vmax.f32 %v744, 0.0
      %v779 = vmax.f32 %v749, 0.0
      %v780 = vmax.f32 %v754, 0.0
      %v781 = vmax.f32 %v759, 0.0
      %v782 = vmax.f32 %v764, 0.0
      %v783 = vld [vmem:[#allocation10] sm:$0xff]
      %v784 = vld [vmem:[#allocation10 + $0x8] sm:$0xff]
      %v785 = vld [vmem:[#allocation10 + $0x10] sm:$0xff]
      %v786 = vld [vmem:[#allocation10 + $0x18] sm:$0xff]
      %v787 = vld [vmem:[#allocation10 + $0x20] sm:$0xff]
      %v788 = vld [vmem:[#allocation10 + $0x28] sm:$0xff]
      %v789 = vld [vmem:[#allocation10 + $0x30] sm:$0xff]
      %v790 = vld [vmem:[#allocation10 + $0x38] sm:$0xff]
      %v791 = vld [vmem:[#allocation10 + $0x40] sm:$0xff]
      %v792 = vld [vmem:[#allocation10 + $0x48] sm:$0xff]
      %v793 = vld [vmem:[#allocation10 + $0x50] sm:$0xff]
      %v794 = vld [vmem:[#allocation10 + $0x58] sm:$0xff]
      %v795 = vld [vmem:[#allocation10 + $0x60] sm:$0xff]
      %v796 = vld [vmem:[#allocation10 + $0x68] sm:$0xff]
      %v797 = vld [vmem:[#allocation10 + $0x70] sm:$0xff]
      %v798 = vld [vmem:[#allocation10 + $0x78] sm:$0xff]
      %v799 = vld [vmem:[%s8] sm:$0x1]
      %v801 = vlaneseq
      %v802 = vshrl.u32 %v801, 7
      %v803 = vsub.s32 0, %v802
      %v804 = vrot.slane %v799, %v803
      %806 = vmatprep.subr.mxu0 0.0
      %807 = vmatpush1.msra.mxu0 %v783
      %808 = vmatprep.subr.mxu0 0.0
      %809 = vmatpush1.msra.mxu0 %v784
      %810 = vmatprep.subr.mxu0 0.0
      %811 = vmatpush1.msra.mxu0 %v785
      %812 = vmatprep.subr.mxu0 0.0
      %813 = vmatpush1.msra.mxu0 %v786
      %814 = vmatprep.subr.mxu0 0.0
      %815 = vmatpush1.msra.mxu0 %v787
      %816 = vmatprep.subr.mxu0 0.0
      %817 = vmatpush1.msra.mxu0 %v788
      %818 = vmatprep.subr.mxu0 0.0
      %819 = vmatpush1.msra.mxu0 %v789
      %820 = vmatprep.subr.mxu0 0.0
      %821 = vmatpush1.msra.mxu0 %v790
      %822 = vmatprep.subr.mxu0 0.0
      %823 = vmatpush1.msra.mxu0 %v791
      %824 = vmatprep.subr.mxu0 0.0
      %825 = vmatpush1.msra.mxu0 %v792
      %826 = vmatprep.subr.mxu0 0.0
      %827 = vmatpush1.msra.mxu0 %v793
      %828 = vmatprep.subr.mxu0 0.0
      %829 = vmatpush1.msra.mxu0 %v794
      %830 = vmatprep.subr.mxu0 0.0
      %831 = vmatpush1.msra.mxu0 %v795
      %832 = vmatprep.subr.mxu0 0.0
      %833 = vmatpush1.msra.mxu0 %v796
      %834 = vmatprep.subr.mxu0 0.0
      %835 = vmatpush1.msra.mxu0 %v797
      %836 = vmatprep.subr.mxu0 0.0
      %837 = vmatpush1.msra.mxu0 %v798
      %838 = vmatprep.subr.mxu0 0.0
      %839 = vmatpush1.msra.mxu0 0.0
      %840 = vmatprep.subr.mxu0 0.0
      %841 = vmatpush1.msra.mxu0 0.0
      %842 = vmatprep.subr.mxu0 0.0
      %843 = vmatpush1.msra.mxu0 0.0
      %844 = vmatprep.subr.mxu0 0.0
      %845 = vmatpush1.msra.mxu0 0.0
      %846 = vmatprep.subr.mxu0 0.0
      %847 = vmatpush1.msra.mxu0 0.0
      %848 = vmatprep.subr.mxu0 0.0
      %849 = vmatpush1.msra.mxu0 0.0
      %850 = vmatprep.subr.mxu0 0.0
      %851 = vmatpush1.msra.mxu0 0.0
      %852 = vmatprep.subr.mxu0 0.0
      %853 = vmatpush1.msra.mxu0 0.0
      %854 = vmatprep.subr.mxu0 0.0
      %855 = vmatpush1.msra.mxu0 0.0
      %856 = vmatprep.subr.mxu0 0.0
      %857 = vmatpush1.msra.mxu0 0.0
      %858 = vmatprep.subr.mxu0 0.0
      %859 = vmatpush1.msra.mxu0 0.0
      %860 = vmatprep.subr.mxu0 0.0
      %861 = vmatpush1.msra.mxu0 0.0
      %862 = vmatprep.subr.mxu0 0.0
      %863 = vmatpush1.msra.mxu0 0.0
      %864 = vmatprep.subr.mxu0 0.0
      %865 = vmatpush1.msra.mxu0 0.0
      %866 = vmatprep.subr.mxu0 0.0
      %867 = vmatpush1.msra.mxu0 0.0
      %868 = vmatprep.subr.mxu0 0.0
      %869 = vmatpush1.msra.mxu0 0.0
      %870 = vmatprep.mubr.f32.mxu0 0.0
      %871 = vmatmul.mubr.f32.gmra.mrb[0].mxu0 %v767
      %v872 = vpop.f32.mrb[0].mxu0
      %v873 = vadd.f32 %v804, %v872
      %v874 = vpop.f32.mrb[0].mxu0
      %875 = vmatprep.mubr.f32.mxu0 0.0
      %876 = vmatmul.mubr.f32.gmra.mrb[0].mxu0 %v768
      %v877 = vpop.f32.mrb[0].mxu0
      %v878 = vadd.f32 %v804, %v877
      %v879 = vpop.f32.mrb[0].mxu0
      %880 = vmatprep.mubr.f32.mxu0 0.0
      %881 = vmatmul.mubr.f32.gmra.mrb[0].mxu0 %v769
      %v882 = vpop.f32.mrb[0].mxu0
      %v883 = vadd.f32 %v804, %v882
      %v884 = vpop.f32.mrb[0].mxu0
      %885 = vmatprep.mubr.f32.mxu0 0.0
      %886 = vmatmul.mubr.f32.gmra.mrb[0].mxu0 %v770
      %v887 = vpop.f32.mrb[0].mxu0
      %v888 = vadd.f32 %v804, %v887
      %v889 = vpop.f32.mrb[0].mxu0
      %890 = vmatprep.mubr.f32.mxu0 0.0
      %891 = vmatmul.mubr.f32.gmra.mrb[0].mxu0 %v771
      %v892 = vpop.f32.mrb[0].mxu0
      %v893 = vadd.f32 %v804, %v892
      %v894 = vpop.f32.mrb[0].mxu0
      %895 = vmatprep.mubr.f32.mxu0 0.0
      %896 = vmatmul.mubr.f32.gmra.mrb[0].mxu0 %v772
      %v897 = vpop.f32.mrb[0].mxu0
      %v898 = vadd.f32 %v804, %v897
      %v899 = vpop.f32.mrb[0].mxu0
      %900 = vmatprep.mubr.f32.mxu0 0.0
      %901 = vmatmul.mubr.f32.gmra.mrb[0].mxu0 %v773
      %v902 = vpop.f32.mrb[0].mxu0
      %v903 = vadd.f32 %v804, %v902
      %v904 = vpop.f32.mrb[0].mxu0
      %905 = vmatprep.mubr.f32.mxu0 0.0
      %906 = vmatmul.mubr.f32.gmra.mrb[0].mxu0 %v774
      %v907 = vpop.f32.mrb[0].mxu0
      %v908 = vadd.f32 %v804, %v907
      %v909 = vpop.f32.mrb[0].mxu0
      %910 = vmatprep.mubr.f32.mxu0 0.0
      %911 = vmatmul.mubr.f32.gmra.mrb[0].mxu0 %v775
      %v912 = vpop.f32.mrb[0].mxu0
      %v913 = vadd.f32 %v804, %v912
      %v914 = vpop.f32.mrb[0].mxu0
      %915 = vmatprep.mubr.f32.mxu0 0.0
      %916 = vmatmul.mubr.f32.gmra.mrb[0].mxu0 %v776
      %v917 = vpop.f32.mrb[0].mxu0
      %v918 = vadd.f32 %v804, %v917
      %v919 = vpop.f32.mrb[0].mxu0
      %920 = vmatprep.mubr.f32.mxu0 0.0
      %921 = vmatmul.mubr.f32.gmra.mrb[0].mxu0 %v777
      %v922 = vpop.f32.mrb[0].mxu0
      %v923 = vadd.f32 %v804, %v922
      %v924 = vpop.f32.mrb[0].mxu0
      %925 = vmatprep.mubr.f32.mxu0 0.0
      %926 = vmatmul.mubr.f32.gmra.mrb[0].mxu0 %v778
      %v927 = vpop.f32.mrb[0].mxu0
      %v928 = vadd.f32 %v804, %v927
      %v929 = vpop.f32.mrb[0].mxu0
      %930 = vmatprep.mubr.f32.mxu0 0.0
      %931 = vmatmul.mubr.f32.gmra.mrb[0].mxu0 %v779
      %v932 = vpop.f32.mrb[0].mxu0
      %v933 = vadd.f32 %v804, %v932
      %v934 = vpop.f32.mrb[0].mxu0
      %935 = vmatprep.mubr.f32.mxu0 0.0
      %936 = vmatmul.mubr.f32.gmra.mrb[0].mxu0 %v780
      %v937 = vpop.f32.mrb[0].mxu0
      %v938 = vadd.f32 %v804, %v937
      %v939 = vpop.f32.mrb[0].mxu0
      %940 = vmatprep.mubr.f32.mxu0 0.0
      %941 = vmatmul.mubr.f32.gmra.mrb[0].mxu0 %v781
      %v942 = vpop.f32.mrb[0].mxu0
      %v943 = vadd.f32 %v804, %v942
      %v944 = vpop.f32.mrb[0].mxu0
      %945 = vmatprep.mubr.f32.mxu0 0.0
      %946 = vmatmul.mubr.f32.gmra.mrb[0].mxu0 %v782
      %v947 = vpop.f32.mrb[0].mxu0
      %v948 = vadd.f32 %v804, %v947
      %v949 = vpop.f32.mrb[0].mxu0
      %950 = vdwg.mxu0
      %v951 = vmax.f32 %v873, 0.0
      %v952 = vmax.f32 %v878, 0.0
      %v953 = vmax.f32 %v883, 0.0
      %v954 = vmax.f32 %v888, 0.0
      %v955 = vmax.f32 %v893, 0.0
      %v956 = vmax.f32 %v898, 0.0
      %v957 = vmax.f32 %v903, 0.0
      %v958 = vmax.f32 %v908, 0.0
      %v959 = vmax.f32 %v913, 0.0
      %v960 = vmax.f32 %v918, 0.0
      %v961 = vmax.f32 %v923, 0.0
      %v962 = vmax.f32 %v928, 0.0
      %v963 = vmax.f32 %v933, 0.0
      %v964 = vmax.f32 %v938, 0.0
      %v965 = vmax.f32 %v943, 0.0
      %v966 = vmax.f32 %v948, 0.0
      %v967 = vld [vmem:[#allocation12] sm:$0xff]
      %v968 = vld [vmem:[#allocation12 + $0x8] sm:$0xff]
      %v969 = vld [vmem:[#allocation12 + $0x10] sm:$0xff]
      %v970 = vld [vmem:[#allocation12 + $0x18] sm:$0xff]
      %v971 = vld [vmem:[#allocation12 + $0x20] sm:$0xff]
      %v972 = vld [vmem:[#allocation12 + $0x28] sm:$0xff]
      %v973 = vld [vmem:[#allocation12 + $0x30] sm:$0xff]
      %v974 = vld [vmem:[#allocation12 + $0x38] sm:$0xff]
      %v975 = vld [vmem:[#allocation12 + $0x40] sm:$0xff]
      %v976 = vld [vmem:[#allocation12 + $0x48] sm:$0xff]
      %v977 = vld [vmem:[#allocation12 + $0x50] sm:$0xff]
      %v978 = vld [vmem:[#allocation12 + $0x58] sm:$0xff]
      %v979 = vld [vmem:[#allocation12 + $0x60] sm:$0xff]
      %v980 = vld [vmem:[#allocation12 + $0x68] sm:$0xff]
      %v981 = vld [vmem:[#allocation12 + $0x70] sm:$0xff]
      %v982 = vld [vmem:[#allocation12 + $0x78] sm:$0xff]
      %v983 = vld [vmem:[%s10] sm:$0x1]
      %v985 = vlaneseq
      %v986 = vshrl.u32 %v985, 7
      %v987 = vsub.s32 0, %v986
      %v988 = vrot.slane %v983, %v987
      %990 = vmatprep.subr.mxu0 0.0
      %991 = vmatpush1.msra.mxu0 %v967
      %992 = vmatprep.subr.mxu0 0.0
      %993 = vmatpush1.msra.mxu0 %v968
      %994 = vmatprep.subr.mxu0 0.0
      %995 = vmatpush1.msra.mxu0 %v969
      %996 = vmatprep.subr.mxu0 0.0
      %997 = vmatpush1.msra.mxu0 %v970
      %998 = vmatprep.subr.mxu0 0.0
      %999 = vmatpush1.msra.mxu0 %v971
      %1000 = vmatprep.subr.mxu0 0.0
      %1001 = vmatpush1.msra.mxu0 %v972
      %1002 = vmatprep.subr.mxu0 0.0
      %1003 = vmatpush1.msra.mxu0 %v973
      %1004 = vmatprep.subr.mxu0 0.0
      %1005 = vmatpush1.msra.mxu0 %v974
      %1006 = vmatprep.subr.mxu0 0.0
      %1007 = vmatpush1.msra.mxu0 %v975
      %1008 = vmatprep.subr.mxu0 0.0
      %1009 = vmatpush1.msra.mxu0 %v976
      %1010 = vmatprep.subr.mxu0 0.0
      %1011 = vmatpush1.msra.mxu0 %v977
      %1012 = vmatprep.subr.mxu0 0.0
      %1013 = vmatpush1.msra.mxu0 %v978
      %1014 = vmatprep.subr.mxu0 0.0
      %1015 = vmatpush1.msra.mxu0 %v979
      %1016 = vmatprep.subr.mxu0 0.0
      %1017 = vmatpush1.msra.mxu0 %v980
      %1018 = vmatprep.subr.mxu0 0.0
      %1019 = vmatpush1.msra.mxu0 %v981
      %1020 = vmatprep.subr.mxu0 0.0
      %1021 = vmatpush1.msra.mxu0 %v982
      %1022 = vmatprep.subr.mxu0 0.0
      %1023 = vmatpush1.msra.mxu0 0.0
      %1024 = vmatprep.subr.mxu0 0.0
      %1025 = vmatpush1.msra.mxu0 0.0
      %1026 = vmatprep.subr.mxu0 0.0
      %1027 = vmatpush1.msra.mxu0 0.0
      %1028 = vmatprep.subr.mxu0 0.0
      %1029 = vmatpush1.msra.mxu0 0.0
      %1030 = vmatprep.subr.mxu0 0.0
      %1031 = vmatpush1.msra.mxu0 0.0
      %1032 = vmatprep.subr.mxu0 0.0
      %1033 = vmatpush1.msra.mxu0 0.0
      %1034 = vmatprep.subr.mxu0 0.0
      %1035 = vmatpush1.msra.mxu0 0.0
      %1036 = vmatprep.subr.mxu0 0.0
      %1037 = vmatpush1.msra.mxu0 0.0
      %1038 = vmatprep.subr.mxu0 0.0
      %1039 = vmatpush1.msra.mxu0 0.0
      %1040 = vmatprep.subr.mxu0 0.0
      %1041 = vmatpush1.msra.mxu0 0.0
      %1042 = vmatprep.subr.mxu0 0.0
      %1043 = vmatpush1.msra.mxu0 0.0
      %1044 = vmatprep.subr.mxu0 0.0
      %1045 = vmatpush1.msra.mxu0 0.0
      %1046 = vmatprep.subr.mxu0 0.0
      %1047 = vmatpush1.msra.mxu0 0.0
      %1048 = vmatprep.subr.mxu0 0.0
      %1049 = vmatpush1.msra.mxu0 0.0
      %1050 = vmatprep.subr.mxu0 0.0
      %1051 = vmatpush1.msra.mxu0 0.0
      %1052 = vmatprep.subr.mxu0 0.0
      %1053 = vmatpush1.msra.mxu0 0.0
      %1054 = vmatprep.mubr.f32.mxu0 0.0
      %1055 = vmatmul.mubr.f32.gmra.mrb[0].mxu0 %v951
      %v1056 = vpop.f32.mrb[0].mxu0
      %v1057 = vadd.f32 %v988, %v1056
      %v1058 = vpop.f32.mrb[0].mxu0
      %1059 = vmatprep.mubr.f32.mxu0 0.0
      %1060 = vmatmul.mubr.f32.gmra.mrb[0].mxu0 %v952
      %v1061 = vpop.f32.mrb[0].mxu0
      %v1062 = vadd.f32 %v988, %v1061
      %v1063 = vpop.f32.mrb[0].mxu0
      %1064 = vmatprep.mubr.f32.mxu0 0.0
      %1065 = vmatmul.mubr.f32.gmra.mrb[0].mxu0 %v953
      %v1066 = vpop.f32.mrb[0].mxu0
      %v1067 = vadd.f32 %v988, %v1066
      %v1068 = vpop.f32.mrb[0].mxu0
      %1069 = vmatprep.mubr.f32.mxu0 0.0
      %1070 = vmatmul.mubr.f32.gmra.mrb[0].mxu0 %v954
      %v1071 = vpop.f32.mrb[0].mxu0
      %v1072 = vadd.f32 %v988, %v1071
      %v1073 = vpop.f32.mrb[0].mxu0
      %1074 = vmatprep.mubr.f32.mxu0 0.0
      %1075 = vmatmul.mubr.f32.gmra.mrb[0].mxu0 %v955
      %v1076 = vpop.f32.mrb[0].mxu0
      %v1077 = vadd.f32 %v988, %v1076
      %v1078 = vpop.f32.mrb[0].mxu0
      %1079 = vmatprep.mubr.f32.mxu0 0.0
      %1080 = vmatmul.mubr.f32.gmra.mrb[0].mxu0 %v956
      %v1081 = vpop.f32.mrb[0].mxu0
      %v1082 = vadd.f32 %v988, %v1081
      %v1083 = vpop.f32.mrb[0].mxu0
      %1084 = vmatprep.mubr.f32.mxu0 0.0
      %1085 = vmatmul.mubr.f32.gmra.mrb[0].mxu0 %v957
      %v1086 = vpop.f32.mrb[0].mxu0
      %v1087 = vadd.f32 %v988, %v1086
      %v1088 = vpop.f32.mrb[0].mxu0
      %1089 = vmatprep.mubr.f32.mxu0 0.0
      %1090 = vmatmul.mubr.f32.gmra.mrb[0].mxu0 %v958
      %v1091 = vpop.f32.mrb[0].mxu0
      %v1092 = vadd.f32 %v988, %v1091
      %v1093 = vpop.f32.mrb[0].mxu0
      %1094 = vmatprep.mubr.f32.mxu0 0.0
      %1095 = vmatmul.mubr.f32.gmra.mrb[0].mxu0 %v959
      %v1096 = vpop.f32.mrb[0].mxu0
      %v1097 = vadd.f32 %v988, %v1096
      %v1098 = vpop.f32.mrb[0].mxu0
      %1099 = vmatprep.mubr.f32.mxu0 0.0
      %1100 = vmatmul.mubr.f32.gmra.mrb[0].mxu0 %v960
      %v1101 = vpop.f32.mrb[0].mxu0
      %v1102 = vadd.f32 %v988, %v1101
      %v1103 = vpop.f32.mrb[0].mxu0
      %1104 = vmatprep.mubr.f32.mxu0 0.0
      %1105 = vmatmul.mubr.f32.gmra.mrb[0].mxu0 %v961
      %v1106 = vpop.f32.mrb[0].mxu0
      %v1107 = vadd.f32 %v988, %v1106
      %v1108 = vpop.f32.mrb[0].mxu0
      %1109 = vmatprep.mubr.f32.mxu0 0.0
      %1110 = vmatmul.mubr.f32.gmra.mrb[0].mxu0 %v962
      %v1111 = vpop.f32.mrb[0].mxu0
      %v1112 = vadd.f32 %v988, %v1111
      %v1113 = vpop.f32.mrb[0].mxu0
      %1114 = vmatprep.mubr.f32.mxu0 0.0
      %1115 = vmatmul.mubr.f32.gmra.mrb[0].mxu0 %v963
      %v1116 = vpop.f32.mrb[0].mxu0
      %v1117 = vadd.f32 %v988, %v1116
      %v1118 = vpop.f32.mrb[0].mxu0
      %1119 = vmatprep.mubr.f32.mxu0 0.0
      %1120 = vmatmul.mubr.f32.gmra.mrb[0].mxu0 %v964
      %v1121 = vpop.f32.mrb[0].mxu0
      %v1122 = vadd.f32 %v988, %v1121
      %v1123 = vpop.f32.mrb[0].mxu0
      %1124 = vmatprep.mubr.f32.mxu0 0.0
      %1125 = vmatmul.mubr.f32.gmra.mrb[0].mxu0 %v965
      %v1126 = vpop.f32.mrb[0].mxu0
      %v1127 = vadd.f32 %v988, %v1126
      %v1128 = vpop.f32.mrb[0].mxu0
      %1129 = vmatprep.mubr.f32.mxu0 0.0
      %1130 = vmatmul.mubr.f32.gmra.mrb[0].mxu0 %v966
      %v1131 = vpop.f32.mrb[0].mxu0
      %v1132 = vadd.f32 %v988, %v1131
      %v1133 = vpop.f32.mrb[0].mxu0
      %1134 = vdwg.mxu0
      %1135 = vst [vmem:[#allocation13] sm:$0xff] %v1057
      %1136 = vst [vmem:[#allocation13 + $0x8] sm:$0xff] %v1062
      %1137 = vst [vmem:[#allocation13 + $0x10] sm:$0xff] %v1067
      %1138 = vst [vmem:[#allocation13 + $0x18] sm:$0xff] %v1072
      %1139 = vst [vmem:[#allocation13 + $0x20] sm:$0xff] %v1077
      %1140 = vst [vmem:[#allocation13 + $0x28] sm:$0xff] %v1082
      %1141 = vst [vmem:[#allocation13 + $0x30] sm:$0xff] %v1087
      %1142 = vst [vmem:[#allocation13 + $0x38] sm:$0xff] %v1092
      %1143 = vst [vmem:[#allocation13 + $0x40] sm:$0xff] %v1097
      %1144 = vst [vmem:[#allocation13 + $0x48] sm:$0xff] %v1102
      %1145 = vst [vmem:[#allocation13 + $0x50] sm:$0xff] %v1107
      %1146 = vst [vmem:[#allocation13 + $0x58] sm:$0xff] %v1112
      %1147 = vst [vmem:[#allocation13 + $0x60] sm:$0xff] %v1117
      %1148 = vst [vmem:[#allocation13 + $0x68] sm:$0xff] %v1122
      %1149 = vst [vmem:[#allocation13 + $0x70] sm:$0xff] %v1127
      %1150 = vst [vmem:[#allocation13 + $0x78] sm:$0xff] %v1132
    $region73: #{tpu_custom_call.1} parent=1 // pred_fallthru
      _
    // Predicated region
    $region74: #{tpu_custom_call.1} parent=1 // pred_check
      _
    $region75: #{tpu_custom_call.1} parent=1 // pred_check_branch
      %1152 = sbr.rel (0) target = $region77
    $region76: #{tpu_custom_call.1} parent=1 // pred_region
      %s1154 = ssub.s32 2048, 2048
      %1155 = vsyncadd [#allocation6], %s1154
      %s1156 = sshll.u32 [#allocation13], 4
      %s1157 = int_to_ptr.vmem [resolvable:$true] %s1156
      %1162 = dma.vmem_to_hbm [thread:$0]  %s1157, 2048, %s11, [#allocation6], 128, 128, 8
    $region77: #{tpu_custom_call.1} parent=1 // pred_fallthru
      _
    // Predicated region
    $region78: #{tpu_custom_call.1} parent=1 // pred_check
      _
    $region79: #{tpu_custom_call.1} parent=1 // pred_check_branch
      %1164 = sbr.rel (0) target = $region81
    $region80: #{tpu_custom_call.1} parent=1 // pred_region
      %1165 = dma.done [#allocation6], 2048
    $region81: #{tpu_custom_call.1} parent=1 // pred_fallthru
      _
    %1166 = vsyncpa [#allocation5], 1
    %1167 = vsyncpa [#allocation8], 1
    %1168 = vsyncpa [#allocation11], 1
    %1169 = vsyncpa [#allocation6], 1

</llo_original>
